<compile_context>
chip_gen: v7x
topology: tpu7x:2x2x1
jax: 0.10.0
libtpu: 0.0.40
codegen_flags: <defaults>
</compile_context>

<pallas_src>
import jax
import jax.numpy as jnp
from jax import lax
from jax.experimental import pallas as pl
from jax.experimental.pallas import tpu as pltpu

EPS = 1e-5


# --------------------------------------------------------------------------- #
# Kernel 1: conv3x3 + ReLU + conv3x3 + ReLU, plus per-image BN partial sums.
# --------------------------------------------------------------------------- #
def _double_conv_kernel(xp_ref, w1_ref, b1_ref, w2_ref, b2_ref,
                        z_ref, st_ref, ypad_scr):
    # xp_ref : (H+2, W*Cin)   one image, H-padded, W and Cin packed on lanes
    # w1_ref : (3, W*Cin,  W*Cout)  banded conv1 weights (one band per dy)
    # w2_ref : (3, W*Cout, W*Cout)  banded conv2 weights
    # b1/b2  : (1, W*Cout)          per-channel bias tiled over W
    # z_ref  : (H, W*Cout)          conv2+ReLU activations (lane dense)
    # st_ref : (2, W*Cout)          [sum(z), sum(z^2)] over H for this image
    # ypad_scr: (H+2, W*Cout) VMEM  H-halo buffer for the conv1 activations
    H, WC = z_ref.shape

    xp = xp_ref[...]                                           # (H+2, W*Cin)

    # conv1: one band matmul per dy (dx taps + W padding live in the weights)
    acc1 = jnp.dot(xp[0:H], w1_ref[0], preferred_element_type=jnp.float32)
    acc1 = acc1 + jnp.dot(xp[1:H + 1], w1_ref[1], preferred_element_type=jnp.float32)
    acc1 = acc1 + jnp.dot(xp[2:H + 2], w1_ref[2], preferred_element_type=jnp.float32)
    y1 = jnp.maximum(acc1 + b1_ref[...], 0.0)                  # (H, W*Cout)

    # H halo for conv2: zero only the two halo rows, overwrite the interior.
    zrow = jnp.zeros((1, WC), dtype=jnp.float32)
    ypad_scr[0:1, :] = zrow
    ypad_scr[H + 1:H + 2, :] = zrow
    ypad_scr[1:H + 1, :] = y1

    # conv2: same banded structure
    acc2 = jnp.dot(ypad_scr[0:H], w2_ref[0], preferred_element_type=jnp.float32)
    acc2 = acc2 + jnp.dot(ypad_scr[1:H + 1], w2_ref[1], preferred_element_type=jnp.float32)
    acc2 = acc2 + jnp.dot(ypad_scr[2:H + 2], w2_ref[2], preferred_element_type=jnp.float32)
    z = jnp.maximum(acc2 + b2_ref[...], 0.0)                   # (H, W*Cout)

    z_ref[...] = z
    st_ref[...] = jnp.concatenate(
        [jnp.sum(z, axis=0, keepdims=True),
         jnp.sum(z * z, axis=0, keepdims=True)], axis=0)


# --------------------------------------------------------------------------- #
# Kernel 2: apply fused BatchNorm affine (out = z * scale + shift), lane dense.
# --------------------------------------------------------------------------- #
def _bn_apply_kernel(z_ref, scale_ref, shift_ref, o_ref):
    o_ref[...] = z_ref[...] * scale_ref[...] + shift_ref[...]


# --------------------------------------------------------------------------- #
# Wrapper glue (layout + weight preprocessing + BN finalize, plain JAX).
# --------------------------------------------------------------------------- #
def _band_weights(w_oihw, W):
    """(Cout, Cin, 3, 3) -> (3, W*Cin, W*Cout) banded matrices, one per dy.

    band[dy, s*Cin + ci, x*Cout + co] = w[co, ci, dy, dx] where s == x + dx - 1,
    and zero otherwise -- this folds both the dx taps and the W zero-padding
    into the weight, so a whole packed row convolves with one matmul.
    """
    Cout, Cin = w_oihw.shape[0], w_oihw.shape[1]
    w = jnp.transpose(w_oihw, (2, 3, 1, 0)).astype(jnp.float32)   # (dy, dx, Cin, Cout)
    s = jnp.arange(W)[None, :, None]
    x = jnp.arange(W)[None, None, :]
    dx = jnp.arange(3)[:, None, None]
    sel = (s == x + dx - 1).astype(jnp.float32)                   # (dx, s, x)
    band = jnp.einsum('asx,yaio->ysixo', sel, w)                  # (dy, s, Cin, x, Cout)
    return band.reshape(3, W * Cin, W * Cout)


def double_conv_block(x_nchw, w1_oihw, b1, w2_oihw, b2, gamma, beta):
    """Forward pass of DoubleConvBlock. Inputs/weights in PyTorch conventions."""
    N, Cin, H, W = x_nchw.shape
    Cout = w1_oihw.shape[0]
    WCin, WCout = W * Cin, W * Cout

    # --- layout glue: NCHW -> (N, H+2, W*Cin) packed rows, H halo only ---
    x_packed = jnp.transpose(x_nchw, (0, 2, 3, 1)).reshape(N, H, WCin).astype(jnp.float32)
    x_packed = jnp.pad(x_packed, ((0, 0), (1, 1), (0, 0)))

    w1_band = _band_weights(w1_oihw, W)            # (3, W*Cin,  W*Cout)
    w2_band = _band_weights(w2_oihw, W)            # (3, W*Cout, W*Cout)
    b1_row = jnp.tile(b1.astype(jnp.float32), W).reshape(1, WCout)
    b2_row = jnp.tile(b2.astype(jnp.float32), W).reshape(1, WCout)

    cparams = pltpu.CompilerParams(dimension_semantics=("parallel",),
                                   vmem_limit_bytes=32 * 1024 * 1024)

    z, stats = pl.pallas_call(
        _double_conv_kernel,
        out_shape=(jax.ShapeDtypeStruct((N, H, WCout), jnp.float32),
                   jax.ShapeDtypeStruct((N, 2, WCout), jnp.float32)),
        grid=(N,),
        in_specs=[
            pl.BlockSpec((None, H + 2, WCin), lambda n: (n, 0, 0)),
            pl.BlockSpec((3, WCin, WCout), lambda n: (0, 0, 0)),
            pl.BlockSpec((1, WCout), lambda n: (0, 0)),
            pl.BlockSpec((3, WCout, WCout), lambda n: (0, 0, 0)),
            pl.BlockSpec((1, WCout), lambda n: (0, 0)),
        ],
        out_specs=(
            pl.BlockSpec((None, H, WCout), lambda n: (n, 0, 0)),
            pl.BlockSpec((None, 2, WCout), lambda n: (n, 0, 0)),
        ),
        scratch_shapes=[pltpu.VMEM((H + 2, WCout), jnp.float32)],
        compiler_params=cparams,
    )(x_packed, w1_band, b1_row, w2_band, b2_row)

    # --- BatchNorm finalize (tiny O(Cout) math, cross-tile reduction) ---
    M = N * H * W
    s = stats.sum(axis=0).reshape(2, W, Cout).sum(axis=1)          # (2, Cout)
    mean = s[0] / M
    var = jnp.maximum(s[1] / M - mean * mean, 0.0)                 # biased variance
    inv_std = lax.rsqrt(var + EPS)
    scale = gamma.astype(jnp.float32) * inv_std
    shift = beta.astype(jnp.float32) - mean * scale
    scale_row = jnp.tile(scale, W).reshape(1, WCout)
    shift_row = jnp.tile(shift, W).reshape(1, WCout)

    out_packed = pl.pallas_call(
        _bn_apply_kernel,
        out_shape=jax.ShapeDtypeStruct((N, H, WCout), jnp.float32),
        grid=(N,),
        in_specs=[
            pl.BlockSpec((None, H, WCout), lambda n: (n, 0, 0)),
            pl.BlockSpec((1, WCout), lambda n: (0, 0)),
            pl.BlockSpec((1, WCout), lambda n: (0, 0)),
        ],
        out_specs=pl.BlockSpec((None, H, WCout), lambda n: (n, 0, 0)),
        compiler_params=cparams,
    )(z, scale_row, shift_row)

    # --- back to PyTorch NCHW ---
    return jnp.transpose(out_packed.reshape(N, H, W, Cout), (0, 3, 1, 2))


# --------------------------------------------------------------------------- #
# Pure-JAX reference (lax conv) for a correctness check.
# --------------------------------------------------------------------------- #
def _reference(x_nchw, w1, b1, w2, b2, gamma, beta):
    dn = ('NCHW', 'OIHW', 'NCHW')
    y = lax.conv_general_dilated(x_nchw, w1, (1, 1), ((1, 1), (1, 1)),
                                 dimension_numbers=dn) + b1[None, :, None, None]
    y = jnp.maximum(y, 0.0)
    z = lax.conv_general_dilated(y, w2, (1, 1), ((1, 1), (1, 1)),
                                 dimension_numbers=dn) + b2[None, :, None, None]
    z = jnp.maximum(z, 0.0)
    mean = jnp.mean(z, axis=(0, 2, 3), keepdims=True)
    var = jnp.mean((z - mean) ** 2, axis=(0, 2, 3), keepdims=True)
    zn = (z - mean) / jnp.sqrt(var + EPS)
    return zn * gamma[None, :, None, None] + beta[None, :, None, None]


if __name__ == "__main__":
    key = jax.random.PRNGKey(0)
    k_x, k_w1, k_b1, k_w2, k_b2, k_g, k_be = jax.random.split(key, 7)

    N, Cin, Cout, H, W = 2, 4, 8, 16, 16

    x = jax.random.normal(k_x, (N, Cin, H, W), dtype=jnp.float32)
    # PyTorch Conv2d weight layout: OIHW
    w1 = 0.2 * jax.random.normal(k_w1, (Cout, Cin, 3, 3), dtype=jnp.float32)
    b1 = 0.1 * jax.random.normal(k_b1, (Cout,), dtype=jnp.float32)
    w2 = 0.2 * jax.random.normal(k_w2, (Cout, Cout, 3, 3), dtype=jnp.float32)
    b2 = 0.1 * jax.random.normal(k_b2, (Cout,), dtype=jnp.float32)
    gamma = 1.0 + 0.05 * jax.random.normal(k_g, (Cout,), dtype=jnp.float32)
    beta = 0.05 * jax.random.normal(k_be, (Cout,), dtype=jnp.float32)

    out = double_conv_block(x, w1, b1, w2, b2, gamma, beta)
    out = jax.block_until_ready(out)

    ref = _reference(x, w1, b1, w2, b2, gamma, beta)
    assert out.shape == (N, Cout, H, W), out.shape
    assert jnp.allclose(out, ref, atol=1e-4, rtol=1e-4), float(jnp.max(jnp.abs(out - ref)))

    print("KERNEL_OK")
</pallas_src>

<mosaic_0001>
module attributes {stable_mosaic.version = 11 : i64} {
  func.func @_double_conv_kernel(%arg0: i32, %arg1: memref<1x18x64xf32, #tpu.memory_space<vmem>>, %arg2: memref<3x64x128xf32, #tpu.memory_space<vmem>>, %arg3: memref<1x128xf32, #tpu.memory_space<vmem>>, %arg4: memref<3x128x128xf32, #tpu.memory_space<vmem>>, %arg5: memref<1x128xf32, #tpu.memory_space<vmem>>, %arg6: memref<1x16x128xf32, #tpu.memory_space<vmem>>, %arg7: memref<1x2x128xf32, #tpu.memory_space<vmem>>, %arg8: memref<18x128xf32, #tpu.memory_space<vmem>>) attributes {dimension_semantics = [#tpu.dimension_semantics<parallel>], iteration_bounds = array<i64: 2>, scalar_prefetch = 0 : i64, scratch_operands = 1 : i64, tpu.core_type = #tpu.core_type<tc>, window_params = [{transform_indices = @transform_0, window_bounds = array<i64: 1, 18, 64>}, {pipeline_mode = #tpu.pipeline_mode<synchronous>, transform_indices = @transform_1, window_bounds = array<i64: 3, 64, 128>}, {pipeline_mode = #tpu.pipeline_mode<synchronous>, transform_indices = @transform_2, window_bounds = array<i64: 1, 128>}, {pipeline_mode = #tpu.pipeline_mode<synchronous>, transform_indices = @transform_3, window_bounds = array<i64: 3, 128, 128>}, {pipeline_mode = #tpu.pipeline_mode<synchronous>, transform_indices = @transform_4, window_bounds = array<i64: 1, 128>}, {transform_indices = @transform_5, window_bounds = array<i64: 1, 16, 128>}, {transform_indices = @transform_6, window_bounds = array<i64: 1, 2, 128>}]} {
    %c0 = arith.constant 0 : index
    %c0_0 = arith.constant 0 : index
    %c0_1 = arith.constant 0 : index
    %0 = vector.load %arg1[%c0, %c0_0, %c0_1] : memref<1x18x64xf32, #tpu.memory_space<vmem>>, vector<1x18x64xf32>
    %1 = vector.shape_cast %0 : vector<1x18x64xf32> to vector<18x64xf32>
    %2 = vector.extract_strided_slice %1 {offsets = [0, 0], sizes = [16, 64], strides = [1, 1]} : vector<18x64xf32> to vector<16x64xf32>
    %c0_2 = arith.constant 0 : index
    %c0_3 = arith.constant 0 : index
    %c0_4 = arith.constant 0 : index
    %3 = vector.load %arg2[%c0_2, %c0_3, %c0_4] : memref<3x64x128xf32, #tpu.memory_space<vmem>>, vector<1x64x128xf32>
    %4 = vector.shape_cast %3 : vector<1x64x128xf32> to vector<64x128xf32>
    %cst = arith.constant dense<0.000000e+00> : vector<16x128xf32>
    %5 = tpu.matmul %2, %4, %cst {dimension_numbers = #tpu.dot_dimension_numbers<[1], [0], [0], [1], [0, 0, 1, 1], [], []>} : vector<16x64xf32>, vector<64x128xf32>, vector<16x128xf32> -> vector<16x128xf32>
    %6 = vector.extract_strided_slice %1 {offsets = [1, 0], sizes = [16, 64], strides = [1, 1]} : vector<18x64xf32> to vector<16x64xf32>
    %c1 = arith.constant 1 : index
    %c0_5 = arith.constant 0 : index
    %c0_6 = arith.constant 0 : index
    %7 = vector.load %arg2[%c1, %c0_5, %c0_6] : memref<3x64x128xf32, #tpu.memory_space<vmem>>, vector<1x64x128xf32>
    %8 = vector.shape_cast %7 : vector<1x64x128xf32> to vector<64x128xf32>
    %cst_7 = arith.constant dense<0.000000e+00> : vector<16x128xf32>
    %9 = tpu.matmul %6, %8, %cst_7 {dimension_numbers = #tpu.dot_dimension_numbers<[1], [0], [0], [1], [0, 0, 1, 1], [], []>} : vector<16x64xf32>, vector<64x128xf32>, vector<16x128xf32> -> vector<16x128xf32>
    %10 = arith.addf %5, %9 : vector<16x128xf32>
    %11 = vector.extract_strided_slice %1 {offsets = [2, 0], sizes = [16, 64], strides = [1, 1]} : vector<18x64xf32> to vector<16x64xf32>
    %c2 = arith.constant 2 : index
    %c0_8 = arith.constant 0 : index
    %c0_9 = arith.constant 0 : index
    %12 = vector.load %arg2[%c2, %c0_8, %c0_9] : memref<3x64x128xf32, #tpu.memory_space<vmem>>, vector<1x64x128xf32>
    %13 = vector.shape_cast %12 : vector<1x64x128xf32> to vector<64x128xf32>
    %cst_10 = arith.constant dense<0.000000e+00> : vector<16x128xf32>
    %14 = tpu.matmul %11, %13, %cst_10 {dimension_numbers = #tpu.dot_dimension_numbers<[1], [0], [0], [1], [0, 0, 1, 1], [], []>} : vector<16x64xf32>, vector<64x128xf32>, vector<16x128xf32> -> vector<16x128xf32>
    %15 = arith.addf %10, %14 : vector<16x128xf32>
    %c0_11 = arith.constant 0 : index
    %c0_12 = arith.constant 0 : index
    %16 = vector.load %arg3[%c0_11, %c0_12] : memref<1x128xf32, #tpu.memory_space<vmem>>, vector<1x128xf32>
    %17 = vector.broadcast %16 : vector<1x128xf32> to vector<16x128xf32>
    %18 = arith.addf %15, %17 : vector<16x128xf32>
    %cst_13 = arith.constant 0.000000e+00 : f32
    %19 = vector.broadcast %cst_13 : f32 to vector<16x128xf32>
    %20 = arith.maximumf %18, %19 : vector<16x128xf32>
    %cst_14 = arith.constant 0.000000e+00 : f32
    %21 = vector.broadcast %cst_14 : f32 to vector<1x128xf32>
    %c0_15 = arith.constant 0 : index
    %c0_16 = arith.constant 0 : index
    %22 = vector.load %arg8[%c0_15, %c0_16] : memref<18x128xf32, #tpu.memory_space<vmem>>, vector<1x128xf32>
    tpu.vector_store %arg8[%c0_15, %c0_16], %21 {strides = array<i32>} : memref<18x128xf32, #tpu.memory_space<vmem>>, vector<1x128xf32>,
    %c17 = arith.constant 17 : index
    %c0_17 = arith.constant 0 : index
    %23 = vector.load %arg8[%c17, %c0_17] : memref<18x128xf32, #tpu.memory_space<vmem>>, vector<1x128xf32>
    tpu.vector_store %arg8[%c17, %c0_17], %21 {strides = array<i32>} : memref<18x128xf32, #tpu.memory_space<vmem>>, vector<1x128xf32>,
    %c1_18 = arith.constant 1 : index
    %c0_19 = arith.constant 0 : index
    %24 = vector.load %arg8[%c1_18, %c0_19] : memref<18x128xf32, #tpu.memory_space<vmem>>, vector<16x128xf32>
    tpu.vector_store %arg8[%c1_18, %c0_19], %20 {strides = array<i32>} : memref<18x128xf32, #tpu.memory_space<vmem>>, vector<16x128xf32>,
    %c0_20 = arith.constant 0 : index
    %c0_21 = arith.constant 0 : index
    %25 = vector.load %arg8[%c0_20, %c0_21] : memref<18x128xf32, #tpu.memory_space<vmem>>, vector<16x128xf32>
    %c0_22 = arith.constant 0 : index
    %c0_23 = arith.constant 0 : index
    %c0_24 = arith.constant 0 : index
    %26 = vector.load %arg4[%c0_22, %c0_23, %c0_24] : memref<3x128x128xf32, #tpu.memory_space<vmem>>, vector<1x128x128xf32>
    %27 = vector.shape_cast %26 : vector<1x128x128xf32> to vector<128x128xf32>
    %cst_25 = arith.constant dense<0.000000e+00> : vector<16x128xf32>
    %28 = tpu.matmul %25, %27, %cst_25 {dimension_numbers = #tpu.dot_dimension_numbers<[1], [0], [0], [1], [0, 0, 1, 1], [], []>} : vector<16x128xf32>, vector<128x128xf32>, vector<16x128xf32> -> vector<16x128xf32>
    %c1_26 = arith.constant 1 : index
    %c0_27 = arith.constant 0 : index
    %29 = vector.load %arg8[%c1_26, %c0_27] : memref<18x128xf32, #tpu.memory_space<vmem>>, vector<16x128xf32>
    %c1_28 = arith.constant 1 : index
    %c0_29 = arith.constant 0 : index
    %c0_30 = arith.constant 0 : index
    %30 = vector.load %arg4[%c1_28, %c0_29, %c0_30] : memref<3x128x128xf32, #tpu.memory_space<vmem>>, vector<1x128x128xf32>
    %31 = vector.shape_cast %30 : vector<1x128x128xf32> to vector<128x128xf32>
    %cst_31 = arith.constant dense<0.000000e+00> : vector<16x128xf32>
    %32 = tpu.matmul %29, %31, %cst_31 {dimension_numbers = #tpu.dot_dimension_numbers<[1], [0], [0], [1], [0, 0, 1, 1], [], []>} : vector<16x128xf32>, vector<128x128xf32>, vector<16x128xf32> -> vector<16x128xf32>
    %33 = arith.addf %28, %32 : vector<16x128xf32>
    %c2_32 = arith.constant 2 : index
    %c0_33 = arith.constant 0 : index
    %34 = vector.load %arg8[%c2_32, %c0_33] : memref<18x128xf32, #tpu.memory_space<vmem>>, vector<16x128xf32>
    %c2_34 = arith.constant 2 : index
    %c0_35 = arith.constant 0 : index
    %c0_36 = arith.constant 0 : index
    %35 = vector.load %arg4[%c2_34, %c0_35, %c0_36] : memref<3x128x128xf32, #tpu.memory_space<vmem>>, vector<1x128x128xf32>
    %36 = vector.shape_cast %35 : vector<1x128x128xf32> to vector<128x128xf32>
    %cst_37 = arith.constant dense<0.000000e+00> : vector<16x128xf32>
    %37 = tpu.matmul %34, %36, %cst_37 {dimension_numbers = #tpu.dot_dimension_numbers<[1], [0], [0], [1], [0, 0, 1, 1], [], []>} : vector<16x128xf32>, vector<128x128xf32>, vector<16x128xf32> -> vector<16x128xf32>
    %38 = arith.addf %33, %37 : vector<16x128xf32>
    %c0_38 = arith.constant 0 : index
    %c0_39 = arith.constant 0 : index
    %39 = vector.load %arg5[%c0_38, %c0_39] : memref<1x128xf32, #tpu.memory_space<vmem>>, vector<1x128xf32>
    %40 = vector.broadcast %39 : vector<1x128xf32> to vector<16x128xf32>
    %41 = arith.addf %38, %40 : vector<16x128xf32>
    %cst_40 = arith.constant 0.000000e+00 : f32
    %42 = vector.broadcast %cst_40 : f32 to vector<16x128xf32>
    %43 = arith.maximumf %41, %42 : vector<16x128xf32>
    %c0_41 = arith.constant 0 : index
    %c0_42 = arith.constant 0 : index
    %c0_43 = arith.constant 0 : index
    %44 = vector.load %arg6[%c0_41, %c0_42, %c0_43] : memref<1x16x128xf32, #tpu.memory_space<vmem>>, vector<1x16x128xf32>
    %45 = vector.shape_cast %44 : vector<1x16x128xf32> to vector<16x128xf32>
    %46 = vector.shape_cast %43 : vector<16x128xf32> to vector<1x16x128xf32>
    tpu.vector_store %arg6[%c0_41, %c0_42, %c0_43], %46 {strides = array<i32>} : memref<1x16x128xf32, #tpu.memory_space<vmem>>, vector<1x16x128xf32>,
    %cst_44 = arith.constant dense<0.000000e+00> : vector<128xf32>
    %47 = vector.multi_reduction <add>, %43, %cst_44 [0] : vector<16x128xf32> to vector<128xf32>
    %48 = vector.shape_cast %47 : vector<128xf32> to vector<1x128xf32>
    %49 = arith.mulf %43, %43 : vector<16x128xf32>
    %cst_45 = arith.constant dense<0.000000e+00> : vector<128xf32>
    %50 = vector.multi_reduction <add>, %49, %cst_45 [0] : vector<16x128xf32> to vector<128xf32>
    %51 = vector.shape_cast %50 : vector<128xf32> to vector<1x128xf32>
    %52 = tpu.concatenate %48, %51 in 0 : vector<1x128xf32>, vector<1x128xf32> -> vector<2x128xf32>
    %c0_46 = arith.constant 0 : index
    %c0_47 = arith.constant 0 : index
    %c0_48 = arith.constant 0 : index
    %53 = vector.load %arg7[%c0_46, %c0_47, %c0_48] : memref<1x2x128xf32, #tpu.memory_space<vmem>>, vector<1x2x128xf32>
    %54 = vector.shape_cast %53 : vector<1x2x128xf32> to vector<2x128xf32>
    %55 = vector.shape_cast %52 : vector<2x128xf32> to vector<1x2x128xf32>
    tpu.vector_store %arg7[%c0_46, %c0_47, %c0_48], %55 {strides = array<i32>} : memref<1x2x128xf32, #tpu.memory_space<vmem>>, vector<1x2x128xf32>,
    return
  }
  func.func @transform_0(%arg0: i32) -> (i32, i32, i32) {
    %c0_i32 = arith.constant 0 : i32
    %c0_i32_0 = arith.constant 0 : i32
    %c0_i32_1 = arith.constant 0 : i32
    return %arg0, %c0_i32, %c0_i32_0 : i32, i32, i32
  }
  func.func @transform_1(%arg0: i32) -> (i32, i32, i32) {
    %c0_i32 = arith.constant 0 : i32
    %c0_i32_0 = arith.constant 0 : i32
    %c0_i32_1 = arith.constant 0 : i32
    %c0_i32_2 = arith.constant 0 : i32
    return %c0_i32, %c0_i32_0, %c0_i32_1 : i32, i32, i32
  }
  func.func @transform_2(%arg0: i32) -> (i32, i32) {
    %c0_i32 = arith.constant 0 : i32
    %c0_i32_0 = arith.constant 0 : i32
    %c0_i32_1 = arith.constant 0 : i32
    return %c0_i32, %c0_i32_0 : i32, i32
  }
  func.func @transform_3(%arg0: i32) -> (i32, i32, i32) {
    %c0_i32 = arith.constant 0 : i32
    %c0_i32_0 = arith.constant 0 : i32
    %c0_i32_1 = arith.constant 0 : i32
    %c0_i32_2 = arith.constant 0 : i32
    return %c0_i32, %c0_i32_0, %c0_i32_1 : i32, i32, i32
  }
  func.func @transform_4(%arg0: i32) -> (i32, i32) {
    %c0_i32 = arith.constant 0 : i32
    %c0_i32_0 = arith.constant 0 : i32
    %c0_i32_1 = arith.constant 0 : i32
    return %c0_i32, %c0_i32_0 : i32, i32
  }
  func.func @transform_5(%arg0: i32) -> (i32, i32, i32) {
    %c0_i32 = arith.constant 0 : i32
    %c0_i32_0 = arith.constant 0 : i32
    %c0_i32_1 = arith.constant 0 : i32
    return %arg0, %c0_i32, %c0_i32_0 : i32, i32, i32
  }
  func.func @transform_6(%arg0: i32) -> (i32, i32, i32) {
    %c0_i32 = arith.constant 0 : i32
    %c0_i32_0 = arith.constant 0 : i32
    %c0_i32_1 = arith.constant 0 : i32
    return %arg0, %c0_i32, %c0_i32_0 : i32, i32, i32
  }
}

</mosaic_0001>

<llo_original>
// kernel: tpu_custom_call.1
$region0: #{tpu_custom_call.1}
  #allocation0 [shape = 'u32[]', space=smem, size = 0x4, offset = 0x4, fixed_abs, tag = 'smem constant byte address 0x4 - core index']
  #allocation1 [shape = 'u32[144,128]{1,0:T(1,128)}', space=vmem, size = 0x12000, scoped, tag = 'internal scratch']
  #allocation2 [shape = 'f32[18,128]{1,0:T(8,128)}', space=vmem, size = 0x3000, scoped, tag = 'scratch operand']
  %s0 = inlined_call_operand.vmem [shape: f32[2,18,64], index: 0, kind: input, shape index: {}]
  %s1 = inlined_call_operand.hbm [shape: f32[3,64,128], index: 1, kind: input, shape index: {}]
  %s2 = inlined_call_operand.vmem [shape: f32[1,128], index: 2, kind: input, shape index: {}]
  %s3 = inlined_call_operand.hbm [shape: f32[3,128,128], index: 3, kind: input, shape index: {}]
  %s4 = inlined_call_operand.vmem [shape: f32[1,128], index: 4, kind: input, shape index: {}]
  %s5 = inlined_call_operand.hbm [shape: f32[2,16,128], index: 5, kind: output, shape index: {0}]
  %s6 = inlined_call_operand.hbm [shape: f32[2,2,128], index: 6, kind: output, shape index: {1}]
  %7 = xla_tuple %s5, %s6
  %s8 = sld [smem:[#allocation0]]
  $region69: #{tpu_custom_call.1} parent=0
    _
  %s10 = ssub.s32 1, %s8
  %s11 = scalar_select 0, %s10, %s8
  $region1: #{tpu_custom_call.1} parent=0
    #allocation3 [shape = 'u8[98304]{0}', space=vmem, size = 0x18000, scoped, tag = 'input window, operand 1, single buffered']
    #allocation4 [shape = 's32[2]{0}', space=sflag, size = 0x8, scoped, tag = 'scoped memory for tpu_custom_call.1']
    #allocation5 [shape = 's32[2]{0}', space=sflag, size = 0x8, scoped, tag = 'scoped memory for tpu_custom_call.1']
    #allocation6 [shape = 'u8[196608]{0}', space=vmem, size = 0x30000, scoped, tag = 'input window, operand 3, single buffered']
    #allocation7 [shape = 's32[1]{0}', space=sflag, size = 0x4, scoped, tag = 'scoped memory for tpu_custom_call.1']
    #allocation8 [shape = 'u8[16384]{0}', space=vmem, size = 0x4000, scoped, tag = 'output window, operand 0']
    #allocation9 [shape = 'u8[2048]{0}', space=vmem, size = 0x800, scoped, tag = 'output window, operand 1']
    #allocation10 [shape = 's32[2]{0}', space=sflag, size = 0x8, scoped, tag = 'scoped memory for tpu_custom_call.1']
    %12 = vsyncpa [#allocation4], 0
    %13 = vsyncpa [#allocation7], 0
    %14 = vsyncpa [#allocation5], 0
    %s15 = scalar_lea.sflag [#allocation5], 1
    %16 = vsyncpa %s15, 0
    %17 = vsyncpa [#allocation10], 0
    %s18 = scalar_lea.sflag [#allocation10], 1
    %19 = vsyncpa %s18, 0
    loop: start=0, step=1, limit=4
    $region2: #{tpu_custom_call.1} parent=1 // loop_pre_header
      _
    $region3: #{tpu_custom_call.1} parent=1 // loop_header
      %s21 = sphi 0, %s25
      %p22 = scmp.ge.s32.totalorder %s21, 4
      %s31 = sphi 0, %s33
      %s34 = sphi 0, %s31
      %s35 = sphi 0, %s34
      %s51 = sphi 0, %s35
      %s55 = sphi 0, %s55
      %s57 = sphi 0, %s55
      %s58 = sphi 0, %s57
      %s72 = sphi 0, %s58
      %s76 = sphi 0, %s76
      %s78 = sphi 0, %s76
      %s79 = sphi 0, %s78
      %s93 = sphi 0, %s79
      %s97 = sphi 0, %s97
      %s99 = sphi 0, %s97
      %s100 = sphi 0, %s99
      %s114 = sphi 0, %s100
      %s118 = sphi 0, %s118
      %s120 = sphi 0, %s118
      %s121 = sphi 0, %s120
      %s135 = sphi 0, %s121
      %s141 = sphi 0, %s143
      %s144 = sphi 0, %s141
      %s145 = sphi 0, %s144
      %s161 = sphi 0, %s145
      %s167 = sphi 0, %s169
      %s170 = sphi 0, %s167
      %s171 = sphi 0, %s170
      %s187 = sphi 0, %s171
    $region4: #{tpu_custom_call.1} parent=1 // loop_header_branch
      %24 = sbr.rel (%p22) target = $region8
    $region5: #{tpu_custom_call.1} parent=1 // loop_body
      %s26 = ssub.s32 %s21, 1
      %s27 = ssub.s32 %s21, 2
      %s28 = sadd.s32 %s21, 1
      %s29 = ssub.s32 %s21, %s28
      %p30 = scmp.eq.s32.totalorder %s29, 0
      %s32 = sadd.s32 %s31, 1
      %s33 = scalar_select %p30, %s31, %s32
      %p36 = pneg %p30
      %p37 = scmp.eq.s32.totalorder %s21, 1
      %p38 = por %p36, %p37
      %p39 = scmp.ne.s32.totalorder %s31, %s34
      %p40 = scmp.eq.s32.totalorder %s21, 0
      %p41 = por %p39, %p40
      %p42 = scmp.ne.s32.totalorder %s31, %s34
      %p43 = scmp.eq.s32.totalorder %s26, 1
      %p44 = por %p42, %p43
      %p45 = scmp.ne.s32.totalorder %s34, %s35
      %p46 = scmp.eq.s32.totalorder %s26, 0
      %p47 = por %p45, %p46
      %p48 = scmp.ne.s32.totalorder %s34, %s35
      %p49 = scmp.eq.s32.totalorder %s27, 1
      %p50 = por %p48, %p49
      %p52 = scmp.ne.s32.totalorder %s35, %s51
      %p53 = scmp.eq.s32.totalorder %s27, 0
      %p54 = por %p52, %p53
      %s56 = sadd.s32 %s55, 1
      %p59 = scmp.eq.s32.totalorder %s21, 1
      %p60 = scmp.ne.s32.totalorder %s55, %s57
      %p61 = scmp.eq.s32.totalorder %s21, 0
      %p62 = por %p60, %p61
      %p63 = scmp.ne.s32.totalorder %s55, %s57
      %p64 = scmp.eq.s32.totalorder %s26, 1
      %p65 = por %p63, %p64
      %p66 = scmp.ne.s32.totalorder %s57, %s58
      %p67 = scmp.eq.s32.totalorder %s26, 0
      %p68 = por %p66, %p67
      %p69 = scmp.ne.s32.totalorder %s57, %s58
      %p70 = scmp.eq.s32.totalorder %s27, 1
      %p71 = por %p69, %p70
      %p73 = scmp.ne.s32.totalorder %s58, %s72
      %p74 = scmp.eq.s32.totalorder %s27, 0
      %p75 = por %p73, %p74
      %s77 = sadd.s32 %s76, 1
      %p80 = scmp.eq.s32.totalorder %s21, 1
      %p81 = scmp.ne.s32.totalorder %s76, %s78
      %p82 = scmp.eq.s32.totalorder %s21, 0
      %p83 = por %p81, %p82
      %p84 = scmp.ne.s32.totalorder %s76, %s78
      %p85 = scmp.eq.s32.totalorder %s26, 1
      %p86 = por %p84, %p85
      %p87 = scmp.ne.s32.totalorder %s78, %s79
      %p88 = scmp.eq.s32.totalorder %s26, 0
      %p89 = por %p87, %p88
      %p90 = scmp.ne.s32.totalorder %s78, %s79
      %p91 = scmp.eq.s32.totalorder %s27, 1
      %p92 = por %p90, %p91
      %p94 = scmp.ne.s32.totalorder %s79, %s93
      %p95 = scmp.eq.s32.totalorder %s27, 0
      %p96 = por %p94, %p95
      %s98 = sadd.s32 %s97, 1
      %p101 = scmp.eq.s32.totalorder %s21, 1
      %p102 = scmp.ne.s32.totalorder %s97, %s99
      %p103 = scmp.eq.s32.totalorder %s21, 0
      %p104 = por %p102, %p103
      %p105 = scmp.ne.s32.totalorder %s97, %s99
      %p106 = scmp.eq.s32.totalorder %s26, 1
      %p107 = por %p105, %p106
      %p108 = scmp.ne.s32.totalorder %s99, %s100
      %p109 = scmp.eq.s32.totalorder %s26, 0
      %p110 = por %p108, %p109
      %p111 = scmp.ne.s32.totalorder %s99, %s100
      %p112 = scmp.eq.s32.totalorder %s27, 1
      %p113 = por %p111, %p112
      %p115 = scmp.ne.s32.totalorder %s100, %s114
      %p116 = scmp.eq.s32.totalorder %s27, 0
      %p117 = por %p115, %p116
      %s119 = sadd.s32 %s118, 1
      %p122 = scmp.eq.s32.totalorder %s21, 1
      %p123 = scmp.ne.s32.totalorder %s118, %s120
      %p124 = scmp.eq.s32.totalorder %s21, 0
      %p125 = por %p123, %p124
      %p126 = scmp.ne.s32.totalorder %s118, %s120
      %p127 = scmp.eq.s32.totalorder %s26, 1
      %p128 = por %p126, %p127
      %p129 = scmp.ne.s32.totalorder %s120, %s121
      %p130 = scmp.eq.s32.totalorder %s26, 0
      %p131 = por %p129, %p130
      %p132 = scmp.ne.s32.totalorder %s120, %s121
      %p133 = scmp.eq.s32.totalorder %s27, 1
      %p134 = por %p132, %p133
      %p136 = scmp.ne.s32.totalorder %s121, %s135
      %p137 = scmp.eq.s32.totalorder %s27, 0
      %p138 = por %p136, %p137
      %s139 = ssub.s32 %s21, %s28
      %p140 = scmp.eq.s32.totalorder %s139, 0
      %s142 = sadd.s32 %s141, 1
      %s143 = scalar_select %p140, %s141, %s142
      %p146 = pneg %p140
      %p147 = scmp.eq.s32.totalorder %s21, 1
      %p148 = por %p146, %p147
      %p149 = scmp.ne.s32.totalorder %s141, %s144
      %p150 = scmp.eq.s32.totalorder %s21, 0
      %p151 = por %p149, %p150
      %p152 = scmp.ne.s32.totalorder %s141, %s144
      %p153 = scmp.eq.s32.totalorder %s26, 1
      %p154 = por %p152, %p153
      %p155 = scmp.ne.s32.totalorder %s144, %s145
      %p156 = scmp.eq.s32.totalorder %s26, 0
      %p157 = por %p155, %p156
      %p158 = scmp.ne.s32.totalorder %s144, %s145
      %p159 = scmp.eq.s32.totalorder %s27, 1
      %p160 = por %p158, %p159
      %p162 = scmp.ne.s32.totalorder %s145, %s161
      %p163 = scmp.eq.s32.totalorder %s27, 0
      %p164 = por %p162, %p163
      %s165 = ssub.s32 %s21, %s28
      %p166 = scmp.eq.s32.totalorder %s165, 0
      %s168 = sadd.s32 %s167, 1
      %s169 = scalar_select %p166, %s167, %s168
      %p172 = pneg %p166
      %p173 = scmp.eq.s32.totalorder %s21, 1
      %p174 = por %p172, %p173
      %p175 = scmp.ne.s32.totalorder %s167, %s170
      %p176 = scmp.eq.s32.totalorder %s21, 0
      %p177 = por %p175, %p176
      %p178 = scmp.ne.s32.totalorder %s167, %s170
      %p179 = scmp.eq.s32.totalorder %s26, 1
      %p180 = por %p178, %p179
      %p181 = scmp.ne.s32.totalorder %s170, %s171
      %p182 = scmp.eq.s32.totalorder %s26, 0
      %p183 = por %p181, %p182
      %p184 = scmp.ne.s32.totalorder %s170, %s171
      %p185 = scmp.eq.s32.totalorder %s27, 1
      %p186 = por %p184, %p185
      %p188 = scmp.ne.s32.totalorder %s171, %s187
      %p189 = scmp.eq.s32.totalorder %s27, 0
      %p190 = por %p188, %p189
      %p191 = scmp.le.s32.totalorder 1, %s21
      %p192 = scmp.lt.s32.totalorder %s21, 3
      %p193 = pnand %p191, %p192
      %p194 = pneg %p193
      // Predicated region
      $region9: #{tpu_custom_call.1} parent=5 // pred_check
        _
      $region10: #{tpu_custom_call.1} parent=5 // pred_check_branch
        %196 = sbr.rel (%p193) target = $region12
      $region11: #{tpu_custom_call.1} parent=5 // pred_region
        %s197 = ssub.s32 %s21, 1
        // Predicated region
        $region13: #{tpu_custom_call.1} parent=11 // pred_check
          %p198 = pneg %p68
        $region14: #{tpu_custom_call.1} parent=11 // pred_check_branch
          %200 = sbr.rel (%p198) target = $region16
        $region15: #{tpu_custom_call.1} parent=11 // pred_region
          %s202 = ssub.s32 3072, 3072
          %203 = vsyncadd [#allocation4], %s202
          %s204 = sshll.u32 [#allocation3], 4
          %s205 = int_to_ptr.vmem [resolvable:$true] %s204
          %210 = dma.hbm_to_vmem [thread:$0]  %s1, 3072, %s205, [#allocation4], 128, 128, 8
        $region16: #{tpu_custom_call.1} parent=11 // pred_fallthru
          _
        // Predicated region
        $region17: #{tpu_custom_call.1} parent=11 // pred_check
          %p211 = pneg %p89
        $region18: #{tpu_custom_call.1} parent=11 // pred_check_branch
          %213 = sbr.rel (%p211) target = $region20
        $region19: #{tpu_custom_call.1} parent=11 // pred_region
          _
        $region20: #{tpu_custom_call.1} parent=11 // pred_fallthru
          _
        // Predicated region
        $region21: #{tpu_custom_call.1} parent=11 // pred_check
          %p214 = pneg %p110
        $region22: #{tpu_custom_call.1} parent=11 // pred_check_branch
          %216 = sbr.rel (%p214) target = $region24
        $region23: #{tpu_custom_call.1} parent=11 // pred_region
          %s218 = ssub.s32 6144, 6144
          %219 = vsyncadd [#allocation7], %s218
          %s220 = sshll.u32 [#allocation6], 4
          %s221 = int_to_ptr.vmem [resolvable:$true] %s220
          %226 = dma.hbm_to_vmem [thread:$0]  %s3, 6144, %s221, [#allocation7], 128, 128, 8
        $region24: #{tpu_custom_call.1} parent=11 // pred_fallthru
          _
        // Predicated region
        $region25: #{tpu_custom_call.1} parent=11 // pred_check
          %p227 = pneg %p131
        $region26: #{tpu_custom_call.1} parent=11 // pred_check_branch
          %229 = sbr.rel (%p227) target = $region28
        $region27: #{tpu_custom_call.1} parent=11 // pred_region
          _
        $region28: #{tpu_custom_call.1} parent=11 // pred_fallthru
          _
      $region12: #{tpu_custom_call.1} parent=5 // pred_fallthru
        _
      %p230 = scmp.lt.s32.totalorder %s21, 2
      // Predicated region
      $region29: #{tpu_custom_call.1} parent=5 // pred_check
        %p231 = pneg %p230
      $region30: #{tpu_custom_call.1} parent=5 // pred_check_branch
        %233 = sbr.rel (%p231) target = $region32
      $region31: #{tpu_custom_call.1} parent=5 // pred_region
        // Predicated region
        $region33: #{tpu_custom_call.1} parent=31 // pred_check
          %p234 = pneg %p41
        $region34: #{tpu_custom_call.1} parent=31 // pred_check_branch
          %236 = sbr.rel (%p234) target = $region36
        $region35: #{tpu_custom_call.1} parent=31 // pred_region
          %p237 = scmp.lt.s32.totalorder %s21, 1
          %s238 = scalar_select %p237, %s21, 1
          %s239 = smul.addr %s238, 3
          %s240 = smul.addr %s239, 8
          %s241 = scalar_lea.vmem %s0, %s240
        $region36: #{tpu_custom_call.1} parent=31 // pred_fallthru
          _
      $region32: #{tpu_custom_call.1} parent=5 // pred_fallthru
        _
      %p242 = scmp.le.s32.totalorder 1, %s21
      %p243 = scmp.lt.s32.totalorder %s21, 3
      %p244 = pnand %p242, %p243
      %p245 = pneg %p244
      // Predicated region
      $region37: #{tpu_custom_call.1} parent=5 // pred_check
        _
      $region38: #{tpu_custom_call.1} parent=5 // pred_check_branch
        %247 = sbr.rel (%p244) target = $region40
      $region39: #{tpu_custom_call.1} parent=5 // pred_region
        %s248 = ssub.s32 %s21, 1
        // Predicated region
        $region41: #{tpu_custom_call.1} parent=39 // pred_check
          %p249 = pneg %p68
        $region42: #{tpu_custom_call.1} parent=39 // pred_check_branch
          %251 = sbr.rel (%p249) target = $region44
        $region43: #{tpu_custom_call.1} parent=39 // pred_region
          %252 = dma.done [#allocation4], 3072
        $region44: #{tpu_custom_call.1} parent=39 // pred_fallthru
          _
        // Predicated region
        $region45: #{tpu_custom_call.1} parent=39 // pred_check
          %p253 = pneg %p110
        $region46: #{tpu_custom_call.1} parent=39 // pred_check_branch
          %255 = sbr.rel (%p253) target = $region48
        $region47: #{tpu_custom_call.1} parent=39 // pred_region
          %256 = dma.done [#allocation7], 6144
        $region48: #{tpu_custom_call.1} parent=39 // pred_fallthru
          _
        %p257 = scmp.lt.s32.totalorder %s26, 1
        %s258 = scalar_select %p257, %s26, 1
        %s259 = smul.addr %s258, 3
        %s260 = smul.addr %s259, 8
        %s261 = scalar_lea.vmem %s0, %s260
        %p262 = pneg %p47
        %p263 = pneg %p44
        %p264 = pneg %p68
        %p265 = pneg %p65
        %p266 = pneg %p89
        %p267 = pneg %p86
        %p268 = pneg %p110
        %p269 = pneg %p107
        %p270 = pneg %p131
        %p271 = pneg %p128
        %p272 = pneg %p157
        %p273 = pneg %p154
        %s274 = sand.u32 %s144, 1
        %s275 = scalar_lea.sflag [#allocation5], %s274
        %s276 = sand.u32 %s144, 1
        %s277 = smul.addr %s276, 16
        %s278 = scalar_lea.vmem [#allocation8], %s277
        %p279 = pneg %p183
        %p280 = pneg %p180
        %s281 = sand.u32 %s170, 1
        %s282 = scalar_lea.sflag [#allocation10], %s281
        %s283 = sand.u32 %s170, 1
        %s284 = smul.addr %s283, 2
        %s285 = scalar_lea.vmem [#allocation9], %s284
        %p286 = scmp.lt.s32.totalorder %s26, 1
        %s287 = scalar_select %p286, %s26, 1
        %s288 = smul.addr %s287, 3
        %s289 = smul.addr %s288, 8
        %s290 = scalar_lea.vmem %s0, %s289
        %v291 = vld [vmem:[%s290] sm:$0xff]
        %v292 = vld [vmem:[%s290 + $0x8] sm:$0xff]
        %v293 = vld [vmem:[%s290 + $0x10] sm:$0x3]
        %v294 = vld [vmem:[#allocation3] sm:$0xff]
        %v295 = vld [vmem:[#allocation3 + $0x8] sm:$0xff]
        %v296 = vld [vmem:[#allocation3 + $0x10] sm:$0xff]
        %v297 = vld [vmem:[#allocation3 + $0x18] sm:$0xff]
        %v298 = vld [vmem:[#allocation3 + $0x20] sm:$0xff]
        %v299 = vld [vmem:[#allocation3 + $0x28] sm:$0xff]
        %v300 = vld [vmem:[#allocation3 + $0x30] sm:$0xff]
        %v301 = vld [vmem:[#allocation3 + $0x38] sm:$0xff]
        %s302 = scalar_lea.vmem [#allocation3], 64
        %v303 = vld [vmem:[%s302] sm:$0xff]
        %v304 = vld [vmem:[%s302 + $0x8] sm:$0xff]
        %v305 = vld [vmem:[%s302 + $0x10] sm:$0xff]
        %v306 = vld [vmem:[%s302 + $0x18] sm:$0xff]
        %v307 = vld [vmem:[%s302 + $0x20] sm:$0xff]
        %v308 = vld [vmem:[%s302 + $0x28] sm:$0xff]
        %v309 = vld [vmem:[%s302 + $0x30] sm:$0xff]
        %v310 = vld [vmem:[%s302 + $0x38] sm:$0xff]
        %vm314 = vcmask 1046528
        %v315 = vrot.slane %v291, 1
        %v316 = vrot.slane %v292, 1
        %v317 = vsel %vm314, %v315, %v316
        %v318 = vrot.slane %v293, 1
        %v319 = vsel %vm314, %v316, %v318
        %vm320 = vcmask 523264
        %v321 = vsel %vm320, %v317, 0
        %v323 = vsel %vm320, %v319, 0
        %325 = vmatprep.subr.mxu0 0.0
        %326 = vmatpush1.msra.mxu0 %v303
        %327 = vmatprep.subr.mxu0 0.0
        %328 = vmatpush1.msra.mxu0 %v304
        %329 = vmatprep.subr.mxu0 0.0
        %330 = vmatpush1.msra.mxu0 %v305
        %331 = vmatprep.subr.mxu0 0.0
        %332 = vmatpush1.msra.mxu0 %v306
        %333 = vmatprep.subr.mxu0 0.0
        %334 = vmatpush1.msra.mxu0 %v307
        %335 = vmatprep.subr.mxu0 0.0
        %336 = vmatpush1.msra.mxu0 %v308
        %337 = vmatprep.subr.mxu0 0.0
        %338 = vmatpush1.msra.mxu0 %v309
        %339 = vmatprep.subr.mxu0 0.0
        %340 = vmatpush1.msra.mxu0 %v310
        %341 = vmatprep.subr.mxu0 0.0
        %342 = vmatpush1.msra.mxu0 0.0
        %343 = vmatprep.subr.mxu0 0.0
        %344 = vmatpush1.msra.mxu0 0.0
        %345 = vmatprep.subr.mxu0 0.0
        %346 = vmatpush1.msra.mxu0 0.0
        %347 = vmatprep.subr.mxu0 0.0
        %348 = vmatpush1.msra.mxu0 0.0
        %349 = vmatprep.subr.mxu0 0.0
        %350 = vmatpush1.msra.mxu0 0.0
        %351 = vmatprep.subr.mxu0 0.0
        %352 = vmatpush1.msra.mxu0 0.0
        %353 = vmatprep.subr.mxu0 0.0
        %354 = vmatpush1.msra.mxu0 0.0
        %355 = vmatprep.subr.mxu0 0.0
        %356 = vmatpush1.msra.mxu0 0.0
        %357 = vmatprep.subr.mxu0 0.0
        %358 = vmatpush1.msra.mxu0 0.0
        %359 = vmatprep.subr.mxu0 0.0
        %360 = vmatpush1.msra.mxu0 0.0
        %361 = vmatprep.subr.mxu0 0.0
        %362 = vmatpush1.msra.mxu0 0.0
        %363 = vmatprep.subr.mxu0 0.0
        %364 = vmatpush1.msra.mxu0 0.0
        %365 = vmatprep.subr.mxu0 0.0
        %366 = vmatpush1.msra.mxu0 0.0
        %367 = vmatprep.subr.mxu0 0.0
        %368 = vmatpush1.msra.mxu0 0.0
        %369 = vmatprep.subr.mxu0 0.0
        %370 = vmatpush1.msra.mxu0 0.0
        %371 = vmatprep.subr.mxu0 0.0
        %372 = vmatpush1.msra.mxu0 0.0
        %373 = vmatprep.subr.mxu0 0.0
        %374 = vmatpush1.msra.mxu0 0.0
        %375 = vmatprep.subr.mxu0 0.0
        %376 = vmatpush1.msra.mxu0 0.0
        %377 = vmatprep.subr.mxu0 0.0
        %378 = vmatpush1.msra.mxu0 0.0
        %379 = vmatprep.subr.mxu0 0.0
        %380 = vmatpush1.msra.mxu0 0.0
        %381 = vmatprep.subr.mxu0 0.0
        %382 = vmatpush1.msra.mxu0 0.0
        %383 = vmatprep.subr.mxu0 0.0
        %384 = vmatpush1.msra.mxu0 0.0
        %385 = vmatprep.subr.mxu0 0.0
        %386 = vmatpush1.msra.mxu0 0.0
        %387 = vmatprep.subr.mxu0 0.0
        %388 = vmatpush1.msra.mxu0 0.0
        %389 = vmatprep.mubr.f32.mxu0 0.0
        %390 = vmatmul.mubr.f32.gmra.mrb[0].mxu0 %v321
        %v391 = vpop.f32.mrb[0].mxu0
        %v392 = vadd.f32 0.0, %v391
        %v393 = vpop.f32.mrb[0].mxu0
        %394 = vmatprep.mubr.f32.mxu0 0.0
        %395 = vmatmul.mubr.f32.gmra.mrb[0].mxu0 %v323
        %v396 = vpop.f32.mrb[0].mxu0
        %v397 = vadd.f32 0.0, %v396
        %v398 = vpop.f32.mrb[0].mxu0
        %399 = vdwg.mxu0
        %v400 = vsel %vm320, %v291, 0
        %v402 = vsel %vm320, %v292, 0
        %404 = vmatprep.subr.mxu0 0.0
        %405 = vmatpush1.msra.mxu0 %v294
        %406 = vmatprep.subr.mxu0 0.0
        %407 = vmatpush1.msra.mxu0 %v295
        %408 = vmatprep.subr.mxu0 0.0
        %409 = vmatpush1.msra.mxu0 %v296
        %410 = vmatprep.subr.mxu0 0.0
        %411 = vmatpush1.msra.mxu0 %v297
        %412 = vmatprep.subr.mxu0 0.0
        %413 = vmatpush1.msra.mxu0 %v298
        %414 = vmatprep.subr.mxu0 0.0
        %415 = vmatpush1.msra.mxu0 %v299
        %416 = vmatprep.subr.mxu0 0.0
        %417 = vmatpush1.msra.mxu0 %v300
        %418 = vmatprep.subr.mxu0 0.0
        %419 = vmatpush1.msra.mxu0 %v301
        %420 = vmatprep.subr.mxu0 0.0
        %421 = vmatpush1.msra.mxu0 0.0
        %422 = vmatprep.subr.mxu0 0.0
        %423 = vmatpush1.msra.mxu0 0.0
        %424 = vmatprep.subr.mxu0 0.0
        %425 = vmatpush1.msra.mxu0 0.0
        %426 = vmatprep.subr.mxu0 0.0
        %427 = vmatpush1.msra.mxu0 0.0
        %428 = vmatprep.subr.mxu0 0.0
        %429 = vmatpush1.msra.mxu0 0.0
        %430 = vmatprep.subr.mxu0 0.0
        %431 = vmatpush1.msra.mxu0 0.0
        %432 = vmatprep.subr.mxu0 0.0
        %433 = vmatpush1.msra.mxu0 0.0
        %434 = vmatprep.subr.mxu0 0.0
        %435 = vmatpush1.msra.mxu0 0.0
        %436 = vmatprep.subr.mxu0 0.0
        %437 = vmatpush1.msra.mxu0 0.0
        %438 = vmatprep.subr.mxu0 0.0
        %439 = vmatpush1.msra.mxu0 0.0
        %440 = vmatprep.subr.mxu0 0.0
        %441 = vmatpush1.msra.mxu0 0.0
        %442 = vmatprep.subr.mxu0 0.0
        %443 = vmatpush1.msra.mxu0 0.0
        %444 = vmatprep.subr.mxu0 0.0
        %445 = vmatpush1.msra.mxu0 0.0
        %446 = vmatprep.subr.mxu0 0.0
        %447 = vmatpush1.msra.mxu0 0.0
        %448 = vmatprep.subr.mxu0 0.0
        %449 = vmatpush1.msra.mxu0 0.0
        %450 = vmatprep.subr.mxu0 0.0
        %451 = vmatpush1.msra.mxu0 0.0
        %452 = vmatprep.subr.mxu0 0.0
        %453 = vmatpush1.msra.mxu0 0.0
        %454 = vmatprep.subr.mxu0 0.0
        %455 = vmatpush1.msra.mxu0 0.0
        %456 = vmatprep.subr.mxu0 0.0
        %457 = vmatpush1.msra.mxu0 0.0
        %458 = vmatprep.subr.mxu0 0.0
        %459 = vmatpush1.msra.mxu0 0.0
        %460 = vmatprep.subr.mxu0 0.0
        %461 = vmatpush1.msra.mxu0 0.0
        %462 = vmatprep.subr.mxu0 0.0
        %463 = vmatpush1.msra.mxu0 0.0
        %464 = vmatprep.subr.mxu0 0.0
        %465 = vmatpush1.msra.mxu0 0.0
        %466 = vmatprep.subr.mxu0 0.0
        %467 = vmatpush1.msra.mxu0 0.0
        %468 = vmatprep.mubr.f32.mxu0 0.0
        %469 = vmatmul.mubr.f32.gmra.mrb[0].mxu0 %v400
        %v470 = vpop.f32.mrb[0].mxu0
        %v471 = vadd.f32 %v392, %v470
        %v472 = vpop.f32.mrb[0].mxu0
        %473 = vmatprep.mubr.f32.mxu0 0.0
        %474 = vmatmul.mubr.f32.gmra.mrb[0].mxu0 %v402
        %v475 = vpop.f32.mrb[0].mxu0
        %v476 = vadd.f32 %v397, %v475
        %v477 = vpop.f32.mrb[0].mxu0
        %478 = vdwg.mxu0
        %s479 = scalar_lea.vmem [#allocation3], 128
        %v480 = vld [vmem:[%s479] sm:$0xff]
        %v481 = vld [vmem:[%s479 + $0x8] sm:$0xff]
        %v482 = vld [vmem:[%s479 + $0x10] sm:$0xff]
        %v483 = vld [vmem:[%s479 + $0x18] sm:$0xff]
        %v484 = vld [vmem:[%s479 + $0x20] sm:$0xff]
        %v485 = vld [vmem:[%s479 + $0x28] sm:$0xff]
        %v486 = vld [vmem:[%s479 + $0x30] sm:$0xff]
        %v487 = vld [vmem:[%s479 + $0x38] sm:$0xff]
        %vm488 = vcmask 1045504
        %v489 = vrot.slane %v291, 2
        %v490 = vrot.slane %v292, 2
        %v491 = vsel %vm488, %v489, %v490
        %v492 = vrot.slane %v293, 2
        %v493 = vsel %vm488, %v490, %v492
        %v494 = vsel %vm320, %v491, 0
        %v496 = vsel %vm320, %v493, 0
        %498 = vmatprep.subr.mxu0 0.0
        %499 = vmatpush1.msra.mxu0 %v480
        %500 = vmatprep.subr.mxu0 0.0
        %501 = vmatpush1.msra.mxu0 %v481
        %502 = vmatprep.subr.mxu0 0.0
        %503 = vmatpush1.msra.mxu0 %v482
        %504 = vmatprep.subr.mxu0 0.0
        %505 = vmatpush1.msra.mxu0 %v483
        %506 = vmatprep.subr.mxu0 0.0
        %507 = vmatpush1.msra.mxu0 %v484
        %508 = vmatprep.subr.mxu0 0.0
        %509 = vmatpush1.msra.mxu0 %v485
        %510 = vmatprep.subr.mxu0 0.0
        %511 = vmatpush1.msra.mxu0 %v486
        %512 = vmatprep.subr.mxu0 0.0
        %513 = vmatpush1.msra.mxu0 %v487
        %514 = vmatprep.subr.mxu0 0.0
        %515 = vmatpush1.msra.mxu0 0.0
        %516 = vmatprep.subr.mxu0 0.0
        %517 = vmatpush1.msra.mxu0 0.0
        %518 = vmatprep.subr.mxu0 0.0
        %519 = vmatpush1.msra.mxu0 0.0
        %520 = vmatprep.subr.mxu0 0.0
        %521 = vmatpush1.msra.mxu0 0.0
        %522 = vmatprep.subr.mxu0 0.0
        %523 = vmatpush1.msra.mxu0 0.0
        %524 = vmatprep.subr.mxu0 0.0
        %525 = vmatpush1.msra.mxu0 0.0
        %526 = vmatprep.subr.mxu0 0.0
        %527 = vmatpush1.msra.mxu0 0.0
        %528 = vmatprep.subr.mxu0 0.0
        %529 = vmatpush1.msra.mxu0 0.0
        %530 = vmatprep.subr.mxu0 0.0
        %531 = vmatpush1.msra.mxu0 0.0
        %532 = vmatprep.subr.mxu0 0.0
        %533 = vmatpush1.msra.mxu0 0.0
        %534 = vmatprep.subr.mxu0 0.0
        %535 = vmatpush1.msra.mxu0 0.0
        %536 = vmatprep.subr.mxu0 0.0
        %537 = vmatpush1.msra.mxu0 0.0
        %538 = vmatprep.subr.mxu0 0.0
        %539 = vmatpush1.msra.mxu0 0.0
        %540 = vmatprep.subr.mxu0 0.0
        %541 = vmatpush1.msra.mxu0 0.0
        %542 = vmatprep.subr.mxu0 0.0
        %543 = vmatpush1.msra.mxu0 0.0
        %544 = vmatprep.subr.mxu0 0.0
        %545 = vmatpush1.msra.mxu0 0.0
        %546 = vmatprep.subr.mxu0 0.0
        %547 = vmatpush1.msra.mxu0 0.0
        %548 = vmatprep.subr.mxu0 0.0
        %549 = vmatpush1.msra.mxu0 0.0
        %550 = vmatprep.subr.mxu0 0.0
        %551 = vmatpush1.msra.mxu0 0.0
        %552 = vmatprep.subr.mxu0 0.0
        %553 = vmatpush1.msra.mxu0 0.0
        %554 = vmatprep.subr.mxu0 0.0
        %555 = vmatpush1.msra.mxu0 0.0
        %556 = vmatprep.subr.mxu0 0.0
        %557 = vmatpush1.msra.mxu0 0.0
        %558 = vmatprep.subr.mxu0 0.0
        %559 = vmatpush1.msra.mxu0 0.0
        %560 = vmatprep.subr.mxu0 0.0
        %561 = vmatpush1.msra.mxu0 0.0
        %562 = vmatprep.mubr.f32.mxu0 0.0
        %563 = vmatmul.mubr.f32.gmra.mrb[0].mxu0 %v494
        %v564 = vpop.f32.mrb[0].mxu0
        %v565 = vadd.f32 0.0, %v564
        %v566 = vpop.f32.mrb[0].mxu0
        %567 = vmatprep.mubr.f32.mxu0 0.0
        %568 = vmatmul.mubr.f32.gmra.mrb[0].mxu0 %v496
        %v569 = vpop.f32.mrb[0].mxu0
        %v570 = vadd.f32 0.0, %v569
        %v571 = vpop.f32.mrb[0].mxu0
        %572 = vdwg.mxu0
        %v573 = vadd.f32 %v471, %v565
        %v574 = vadd.f32 %v476, %v570
        %v575 = vld [vmem:[%s2] sm:$0x1]
        %v577 = vlaneseq
        %v578 = vshrl.u32 %v577, 7
        %v579 = vsub.s32 0, %v578
        %v580 = vrot.slane %v575, %v579
        %v582 = vadd.f32 %v573, %v580
        %v583 = vadd.f32 %v574, %v580
        %v584 = vmax.f32 %v582, 0.0
        %v585 = vmax.f32 %v583, 0.0
        %586 = vst [vmem:[#allocation2] sm:$0x1] 0.0
        %587 = vst [vmem:[#allocation2 + $0x11] sm:$0x1] 0.0
        %588 = vst [vmem:[#allocation2 + $0x1] sm:$0xff] %v584
        %589 = vst [vmem:[#allocation2 + $0x9] sm:$0xff] %v585
        %v590 = vld [vmem:[#allocation2] sm:$0xff]
        %v591 = vld [vmem:[#allocation2 + $0x8] sm:$0xff]
        %v592 = vld [vmem:[#allocation6] sm:$0xff]
        %v593 = vld [vmem:[#allocation6 + $0x8] sm:$0xff]
        %v594 = vld [vmem:[#allocation6 + $0x10] sm:$0xff]
        %v595 = vld [vmem:[#allocation6 + $0x18] sm:$0xff]
        %v596 = vld [vmem:[#allocation6 + $0x20] sm:$0xff]
        %v597 = vld [vmem:[#allocation6 + $0x28] sm:$0xff]
        %v598 = vld [vmem:[#allocation6 + $0x30] sm:$0xff]
        %v599 = vld [vmem:[#allocation6 + $0x38] sm:$0xff]
        %v600 = vld [vmem:[#allocation6 + $0x40] sm:$0xff]
        %v601 = vld [vmem:[#allocation6 + $0x48] sm:$0xff]
        %v602 = vld [vmem:[#allocation6 + $0x50] sm:$0xff]
        %v603 = vld [vmem:[#allocation6 + $0x58] sm:$0xff]
        %v604 = vld [vmem:[#allocation6 + $0x60] sm:$0xff]
        %v605 = vld [vmem:[#allocation6 + $0x68] sm:$0xff]
        %v606 = vld [vmem:[#allocation6 + $0x70] sm:$0xff]
        %v607 = vld [vmem:[#allocation6 + $0x78] sm:$0xff]
        %v608 = vld [vmem:[#allocation2 + $0x1] sm:$0xff]
        %v609 = vld [vmem:[#allocation2 + $0x9] sm:$0xff]
        %s610 = scalar_lea.vmem [#allocation6], 128
        %v611 = vld [vmem:[%s610] sm:$0xff]
        %v612 = vld [vmem:[%s610 + $0x8] sm:$0xff]
        %v613 = vld [vmem:[%s610 + $0x10] sm:$0xff]
        %v614 = vld [vmem:[%s610 + $0x18] sm:$0xff]
        %v615 = vld [vmem:[%s610 + $0x20] sm:$0xff]
        %v616 = vld [vmem:[%s610 + $0x28] sm:$0xff]
        %v617 = vld [vmem:[%s610 + $0x30] sm:$0xff]
        %v618 = vld [vmem:[%s610 + $0x38] sm:$0xff]
        %v619 = vld [vmem:[%s610 + $0x40] sm:$0xff]
        %v620 = vld [vmem:[%s610 + $0x48] sm:$0xff]
        %v621 = vld [vmem:[%s610 + $0x50] sm:$0xff]
        %v622 = vld [vmem:[%s610 + $0x58] sm:$0xff]
        %v623 = vld [vmem:[%s610 + $0x60] sm:$0xff]
        %v624 = vld [vmem:[%s610 + $0x68] sm:$0xff]
        %v625 = vld [vmem:[%s610 + $0x70] sm:$0xff]
        %v626 = vld [vmem:[%s610 + $0x78] sm:$0xff]
        %627 = vmatprep.subr.mxu0 0.0
        %628 = vmatpush1.msra.mxu0 %v611
        %629 = vmatprep.subr.mxu0 0.0
        %630 = vmatpush1.msra.mxu0 %v612
        %631 = vmatprep.subr.mxu0 0.0
        %632 = vmatpush1.msra.mxu0 %v613
        %633 = vmatprep.subr.mxu0 0.0
        %634 = vmatpush1.msra.mxu0 %v614
        %635 = vmatprep.subr.mxu0 0.0
        %636 = vmatpush1.msra.mxu0 %v615
        %637 = vmatprep.subr.mxu0 0.0
        %638 = vmatpush1.msra.mxu0 %v616
        %639 = vmatprep.subr.mxu0 0.0
        %640 = vmatpush1.msra.mxu0 %v617
        %641 = vmatprep.subr.mxu0 0.0
        %642 = vmatpush1.msra.mxu0 %v618
        %643 = vmatprep.subr.mxu0 0.0
        %644 = vmatpush1.msra.mxu0 %v619
        %645 = vmatprep.subr.mxu0 0.0
        %646 = vmatpush1.msra.mxu0 %v620
        %647 = vmatprep.subr.mxu0 0.0
        %648 = vmatpush1.msra.mxu0 %v621
        %649 = vmatprep.subr.mxu0 0.0
        %650 = vmatpush1.msra.mxu0 %v622
        %651 = vmatprep.subr.mxu0 0.0
        %652 = vmatpush1.msra.mxu0 %v623
        %653 = vmatprep.subr.mxu0 0.0
        %654 = vmatpush1.msra.mxu0 %v624
        %655 = vmatprep.subr.mxu0 0.0
        %656 = vmatpush1.msra.mxu0 %v625
        %657 = vmatprep.subr.mxu0 0.0
        %658 = vmatpush1.msra.mxu0 %v626
        %659 = vmatprep.subr.mxu0 0.0
        %660 = vmatpush1.msra.mxu0 0.0
        %661 = vmatprep.subr.mxu0 0.0
        %662 = vmatpush1.msra.mxu0 0.0
        %663 = vmatprep.subr.mxu0 0.0
        %664 = vmatpush1.msra.mxu0 0.0
        %665 = vmatprep.subr.mxu0 0.0
        %666 = vmatpush1.msra.mxu0 0.0
        %667 = vmatprep.subr.mxu0 0.0
        %668 = vmatpush1.msra.mxu0 0.0
        %669 = vmatprep.subr.mxu0 0.0
        %670 = vmatpush1.msra.mxu0 0.0
        %671 = vmatprep.subr.mxu0 0.0
        %672 = vmatpush1.msra.mxu0 0.0
        %673 = vmatprep.subr.mxu0 0.0
        %674 = vmatpush1.msra.mxu0 0.0
        %675 = vmatprep.subr.mxu0 0.0
        %676 = vmatpush1.msra.mxu0 0.0
        %677 = vmatprep.subr.mxu0 0.0
        %678 = vmatpush1.msra.mxu0 0.0
        %679 = vmatprep.subr.mxu0 0.0
        %680 = vmatpush1.msra.mxu0 0.0
        %681 = vmatprep.subr.mxu0 0.0
        %682 = vmatpush1.msra.mxu0 0.0
        %683 = vmatprep.subr.mxu0 0.0
        %684 = vmatpush1.msra.mxu0 0.0
        %685 = vmatprep.subr.mxu0 0.0
        %686 = vmatpush1.msra.mxu0 0.0
        %687 = vmatprep.subr.mxu0 0.0
        %688 = vmatpush1.msra.mxu0 0.0
        %689 = vmatprep.subr.mxu0 0.0
        %690 = vmatpush1.msra.mxu0 0.0
        %691 = vmatprep.mubr.f32.mxu0 0.0
        %692 = vmatmul.mubr.f32.gmra.mrb[0].mxu0 %v608
        %v693 = vpop.f32.mrb[0].mxu0
        %v694 = vadd.f32 0.0, %v693
        %v695 = vpop.f32.mrb[0].mxu0
        %696 = vmatprep.mubr.f32.mxu0 0.0
        %697 = vmatmul.mubr.f32.gmra.mrb[0].mxu0 %v609
        %v698 = vpop.f32.mrb[0].mxu0
        %v699 = vadd.f32 0.0, %v698
        %v700 = vpop.f32.mrb[0].mxu0
        %701 = vdwg.mxu0
        %702 = vmatprep.subr.mxu0 0.0
        %703 = vmatpush1.msra.mxu0 %v592
        %704 = vmatprep.subr.mxu0 0.0
        %705 = vmatpush1.msra.mxu0 %v593
        %706 = vmatprep.subr.mxu0 0.0
        %707 = vmatpush1.msra.mxu0 %v594
        %708 = vmatprep.subr.mxu0 0.0
        %709 = vmatpush1.msra.mxu0 %v595
        %710 = vmatprep.subr.mxu0 0.0
        %711 = vmatpush1.msra.mxu0 %v596
        %712 = vmatprep.subr.mxu0 0.0
        %713 = vmatpush1.msra.mxu0 %v597
        %714 = vmatprep.subr.mxu0 0.0
        %715 = vmatpush1.msra.mxu0 %v598
        %716 = vmatprep.subr.mxu0 0.0
        %717 = vmatpush1.msra.mxu0 %v599
        %718 = vmatprep.subr.mxu0 0.0
        %719 = vmatpush1.msra.mxu0 %v600
        %720 = vmatprep.subr.mxu0 0.0
        %721 = vmatpush1.msra.mxu0 %v601
        %722 = vmatprep.subr.mxu0 0.0
        %723 = vmatpush1.msra.mxu0 %v602
        %724 = vmatprep.subr.mxu0 0.0
        %725 = vmatpush1.msra.mxu0 %v603
        %726 = vmatprep.subr.mxu0 0.0
        %727 = vmatpush1.msra.mxu0 %v604
        %728 = vmatprep.subr.mxu0 0.0
        %729 = vmatpush1.msra.mxu0 %v605
        %730 = vmatprep.subr.mxu0 0.0
        %731 = vmatpush1.msra.mxu0 %v606
        %732 = vmatprep.subr.mxu0 0.0
        %733 = vmatpush1.msra.mxu0 %v607
        %734 = vmatprep.subr.mxu0 0.0
        %735 = vmatpush1.msra.mxu0 0.0
        %736 = vmatprep.subr.mxu0 0.0
        %737 = vmatpush1.msra.mxu0 0.0
        %738 = vmatprep.subr.mxu0 0.0
        %739 = vmatpush1.msra.mxu0 0.0
        %740 = vmatprep.subr.mxu0 0.0
        %741 = vmatpush1.msra.mxu0 0.0
        %742 = vmatprep.subr.mxu0 0.0
        %743 = vmatpush1.msra.mxu0 0.0
        %744 = vmatprep.subr.mxu0 0.0
        %745 = vmatpush1.msra.mxu0 0.0
        %746 = vmatprep.subr.mxu0 0.0
        %747 = vmatpush1.msra.mxu0 0.0
        %748 = vmatprep.subr.mxu0 0.0
        %749 = vmatpush1.msra.mxu0 0.0
        %750 = vmatprep.subr.mxu0 0.0
        %751 = vmatpush1.msra.mxu0 0.0
        %752 = vmatprep.subr.mxu0 0.0
        %753 = vmatpush1.msra.mxu0 0.0
        %754 = vmatprep.subr.mxu0 0.0
        %755 = vmatpush1.msra.mxu0 0.0
        %756 = vmatprep.subr.mxu0 0.0
        %757 = vmatpush1.msra.mxu0 0.0
        %758 = vmatprep.subr.mxu0 0.0
        %759 = vmatpush1.msra.mxu0 0.0
        %760 = vmatprep.subr.mxu0 0.0
        %761 = vmatpush1.msra.mxu0 0.0
        %762 = vmatprep.subr.mxu0 0.0
        %763 = vmatpush1.msra.mxu0 0.0
        %764 = vmatprep.subr.mxu0 0.0
        %765 = vmatpush1.msra.mxu0 0.0
        %766 = vmatprep.mubr.f32.mxu0 0.0
        %767 = vmatmul.mubr.f32.gmra.mrb[0].mxu0 %v590
        %v768 = vpop.f32.mrb[0].mxu0
        %v769 = vadd.f32 %v694, %v768
        %v770 = vpop.f32.mrb[0].mxu0
        %771 = vmatprep.mubr.f32.mxu0 0.0
        %772 = vmatmul.mubr.f32.gmra.mrb[0].mxu0 %v591
        %v773 = vpop.f32.mrb[0].mxu0
        %v774 = vadd.f32 %v699, %v773
        %v775 = vpop.f32.mrb[0].mxu0
        %776 = vdwg.mxu0
        %v777 = vld [vmem:[#allocation2 + $0x2] sm:$0xff]
        %v778 = vld [vmem:[#allocation2 + $0xa] sm:$0xff]
        %s779 = scalar_lea.vmem [#allocation6], 256
        %v780 = vld [vmem:[%s779] sm:$0xff]
        %v781 = vld [vmem:[%s779 + $0x8] sm:$0xff]
        %v782 = vld [vmem:[%s779 + $0x10] sm:$0xff]
        %v783 = vld [vmem:[%s779 + $0x18] sm:$0xff]
        %v784 = vld [vmem:[%s779 + $0x20] sm:$0xff]
        %v785 = vld [vmem:[%s779 + $0x28] sm:$0xff]
        %v786 = vld [vmem:[%s779 + $0x30] sm:$0xff]
        %v787 = vld [vmem:[%s779 + $0x38] sm:$0xff]
        %v788 = vld [vmem:[%s779 + $0x40] sm:$0xff]
        %v789 = vld [vmem:[%s779 + $0x48] sm:$0xff]
        %v790 = vld [vmem:[%s779 + $0x50] sm:$0xff]
        %v791 = vld [vmem:[%s779 + $0x58] sm:$0xff]
        %v792 = vld [vmem:[%s779 + $0x60] sm:$0xff]
        %v793 = vld [vmem:[%s779 + $0x68] sm:$0xff]
        %v794 = vld [vmem:[%s779 + $0x70] sm:$0xff]
        %v795 = vld [vmem:[%s779 + $0x78] sm:$0xff]
        %796 = vmatprep.subr.mxu0 0.0
        %797 = vmatpush1.msra.mxu0 %v780
        %798 = vmatprep.subr.mxu0 0.0
        %799 = vmatpush1.msra.mxu0 %v781
        %800 = vmatprep.subr.mxu0 0.0
        %801 = vmatpush1.msra.mxu0 %v782
        %802 = vmatprep.subr.mxu0 0.0
        %803 = vmatpush1.msra.mxu0 %v783
        %804 = vmatprep.subr.mxu0 0.0
        %805 = vmatpush1.msra.mxu0 %v784
        %806 = vmatprep.subr.mxu0 0.0
        %807 = vmatpush1.msra.mxu0 %v785
        %808 = vmatprep.subr.mxu0 0.0
        %809 = vmatpush1.msra.mxu0 %v786
        %810 = vmatprep.subr.mxu0 0.0
        %811 = vmatpush1.msra.mxu0 %v787
        %812 = vmatprep.subr.mxu0 0.0
        %813 = vmatpush1.msra.mxu0 %v788
        %814 = vmatprep.subr.mxu0 0.0
        %815 = vmatpush1.msra.mxu0 %v789
        %816 = vmatprep.subr.mxu0 0.0
        %817 = vmatpush1.msra.mxu0 %v790
        %818 = vmatprep.subr.mxu0 0.0
        %819 = vmatpush1.msra.mxu0 %v791
        %820 = vmatprep.subr.mxu0 0.0
        %821 = vmatpush1.msra.mxu0 %v792
        %822 = vmatprep.subr.mxu0 0.0
        %823 = vmatpush1.msra.mxu0 %v793
        %824 = vmatprep.subr.mxu0 0.0
        %825 = vmatpush1.msra.mxu0 %v794
        %826 = vmatprep.subr.mxu0 0.0
        %827 = vmatpush1.msra.mxu0 %v795
        %828 = vmatprep.subr.mxu0 0.0
        %829 = vmatpush1.msra.mxu0 0.0
        %830 = vmatprep.subr.mxu0 0.0
        %831 = vmatpush1.msra.mxu0 0.0
        %832 = vmatprep.subr.mxu0 0.0
        %833 = vmatpush1.msra.mxu0 0.0
        %834 = vmatprep.subr.mxu0 0.0
        %835 = vmatpush1.msra.mxu0 0.0
        %836 = vmatprep.subr.mxu0 0.0
        %837 = vmatpush1.msra.mxu0 0.0
        %838 = vmatprep.subr.mxu0 0.0
        %839 = vmatpush1.msra.mxu0 0.0
        %840 = vmatprep.subr.mxu0 0.0
        %841 = vmatpush1.msra.mxu0 0.0
        %842 = vmatprep.subr.mxu0 0.0
        %843 = vmatpush1.msra.mxu0 0.0
        %844 = vmatprep.subr.mxu0 0.0
        %845 = vmatpush1.msra.mxu0 0.0
        %846 = vmatprep.subr.mxu0 0.0
        %847 = vmatpush1.msra.mxu0 0.0
        %848 = vmatprep.subr.mxu0 0.0
        %849 = vmatpush1.msra.mxu0 0.0
        %850 = vmatprep.subr.mxu0 0.0
        %851 = vmatpush1.msra.mxu0 0.0
        %852 = vmatprep.subr.mxu0 0.0
        %853 = vmatpush1.msra.mxu0 0.0
        %854 = vmatprep.subr.mxu0 0.0
        %855 = vmatpush1.msra.mxu0 0.0
        %856 = vmatprep.subr.mxu0 0.0
        %857 = vmatpush1.msra.mxu0 0.0
        %858 = vmatprep.subr.mxu0 0.0
        %859 = vmatpush1.msra.mxu0 0.0
        %860 = vmatprep.mubr.f32.mxu0 0.0
        %861 = vmatmul.mubr.f32.gmra.mrb[0].mxu0 %v777
        %v862 = vpop.f32.mrb[0].mxu0
        %v863 = vadd.f32 0.0, %v862
        %v864 = vpop.f32.mrb[0].mxu0
        %865 = vmatprep.mubr.f32.mxu0 0.0
        %866 = vmatmul.mubr.f32.gmra.mrb[0].mxu0 %v778
        %v867 = vpop.f32.mrb[0].mxu0
        %v868 = vadd.f32 0.0, %v867
        %v869 = vpop.f32.mrb[0].mxu0
        %870 = vdwg.mxu0
        %v871 = vadd.f32 %v769, %v863
        %v872 = vadd.f32 %v774, %v868
        %v873 = vld [vmem:[%s4] sm:$0x1]
        %v875 = vlaneseq
        %v876 = vshrl.u32 %v875, 7
        %v877 = vsub.s32 0, %v876
        %v878 = vrot.slane %v873, %v877
        %v880 = vadd.f32 %v871, %v878
        %v881 = vadd.f32 %v872, %v878
        %v882 = vmax.f32 %v880, 0.0
        %v883 = vmax.f32 %v881, 0.0
        %884 = vst [vmem:[%s278] sm:$0xff] %v882
        %885 = vst [vmem:[%s278 + $0x8] sm:$0xff] %v883
        %v886 = vadd.f32 %v882, %v883
        %v887 = vrot.slane %v886, 4
        %v888 = vadd.f32 %v886, %v887
        %v889 = vrot.slane %v888, 2
        %v890 = vadd.f32 %v888, %v889
        %v891 = vrot.slane %v890, 1
        %v892 = vadd.f32 %v890, %v891
        %v893 = vmul.f32 %v882, %v882
        %v894 = vmul.f32 %v883, %v883
        %v895 = vadd.f32 %v893, %v894
        %v896 = vrot.slane %v895, 4
        %v897 = vadd.f32 %v895, %v896
        %v898 = vrot.slane %v897, 2
        %v899 = vadd.f32 %v897, %v898
        %v900 = vrot.slane %v899, 1
        %v901 = vadd.f32 %v899, %v900
        %vm902 = vcmask 1040384
        %v903 = vsel %vm902, %v892, %v901
        %904 = vst [vmem:[%s285] sm:$0x3] %v903
        %s905 = sand.u32 %s144, 1
        %s906 = scalar_lea.sflag [#allocation5], %s905
        %s907 = sand.u32 %s144, 1
        %s908 = smul.addr %s907, 16
        %s909 = scalar_lea.vmem [#allocation8], %s908
        %s910 = sand.u32 %s170, 1
        %s911 = scalar_lea.sflag [#allocation10], %s910
        %s912 = sand.u32 %s170, 1
        %s913 = smul.addr %s912, 2
        %s914 = scalar_lea.vmem [#allocation9], %s913
        // Predicated region
        $region49: #{tpu_custom_call.1} parent=39 // pred_check
          %p915 = pneg %p154
        $region50: #{tpu_custom_call.1} parent=39 // pred_check_branch
          %917 = sbr.rel (%p915) target = $region52
        $region51: #{tpu_custom_call.1} parent=39 // pred_region
          %s919 = ssub.s32 256, 256
          %920 = vsyncadd %s906, %s919
          %s921 = smul.addr %s26, 2
          %s922 = smul.addr %s921, 128
          %s923 = scalar_lea.hbm %s5, %s922
          %s924 = sshll.u32 %s909, 4
          %s925 = int_to_ptr.vmem [resolvable:$true] %s924
          %930 = dma.vmem_to_hbm [thread:$0]  %s925, 256, %s923, %s906, 128, 128, 8
        $region52: #{tpu_custom_call.1} parent=39 // pred_fallthru
          _
        // Predicated region
        $region53: #{tpu_custom_call.1} parent=39 // pred_check
          %p931 = pneg %p180
        $region54: #{tpu_custom_call.1} parent=39 // pred_check_branch
          %933 = sbr.rel (%p931) target = $region56
        $region55: #{tpu_custom_call.1} parent=39 // pred_region
          %s935 = ssub.s32 32, 32
          %936 = vsyncadd %s911, %s935
          %s937 = smul.addr %s26, 32
          %s938 = scalar_lea.hbm %s6, %s937
          %s940 = sshll.u32 %s914, 4
          %s941 = int_to_ptr.vmem [resolvable:$true] %s940
          %943 = dma.vmem_to_hbm [thread:$0]  %s941, 32, %s938, %s911
        $region56: #{tpu_custom_call.1} parent=39 // pred_fallthru
          _
      $region40: #{tpu_custom_call.1} parent=5 // pred_fallthru
        _
      %p944 = scmp.le.s32.totalorder 2, %s21
      // Predicated region
      $region57: #{tpu_custom_call.1} parent=5 // pred_check
        %p945 = pneg %p944
      $region58: #{tpu_custom_call.1} parent=5 // pred_check_branch
        %947 = sbr.rel (%p945) target = $region60
      $region59: #{tpu_custom_call.1} parent=5 // pred_region
        %s948 = ssub.s32 %s21, 2
        // Predicated region
        $region61: #{tpu_custom_call.1} parent=59 // pred_check
          %p949 = pneg %p160
        $region62: #{tpu_custom_call.1} parent=59 // pred_check_branch
          %951 = sbr.rel (%p949) target = $region64
        $region63: #{tpu_custom_call.1} parent=59 // pred_region
          %s952 = sand.u32 %s145, 1
          %s953 = scalar_lea.sflag [#allocation5], %s952
          %s954 = sand.u32 %s145, 1
          %s955 = smul.addr %s954, 16
          %s956 = scalar_lea.vmem [#allocation8], %s955
          %957 = dma.done %s953, 256
        $region64: #{tpu_custom_call.1} parent=59 // pred_fallthru
          _
        // Predicated region
        $region65: #{tpu_custom_call.1} parent=59 // pred_check
          %p958 = pneg %p186
        $region66: #{tpu_custom_call.1} parent=59 // pred_check_branch
          %960 = sbr.rel (%p958) target = $region68
        $region67: #{tpu_custom_call.1} parent=59 // pred_region
          %s961 = sand.u32 %s171, 1
          %s962 = scalar_lea.sflag [#allocation10], %s961
          %s963 = sand.u32 %s171, 1
          %s964 = smul.addr %s963, 2
          %s965 = scalar_lea.vmem [#allocation9], %s964
          %966 = dma.done %s962, 32
        $region68: #{tpu_custom_call.1} parent=59 // pred_fallthru
          _
      $region60: #{tpu_custom_call.1} parent=5 // pred_fallthru
        _
    $region6: #{tpu_custom_call.1} parent=1 // loop_footer
      %s25 = sadd.s32 1, %s21
    $region7: #{tpu_custom_call.1} parent=1 // loop_footer_branch
      %20 = sbr.rel target = $region3
    $region8: #{tpu_custom_call.1} parent=1 // loop_exit
      _
    %967 = vsyncpa [#allocation4], 1
    %s968 = scalar_lea.sflag [#allocation4], 1
    %969 = vsyncpa %s968, 1
    %970 = vsyncpa [#allocation7], 1
    %971 = vsyncpa [#allocation5], 1
    %s972 = scalar_lea.sflag [#allocation5], 1
    %973 = vsyncpa %s972, 1
    %974 = vsyncpa [#allocation10], 1
    %s975 = scalar_lea.sflag [#allocation10], 1
    %976 = vsyncpa %s975, 1

</llo_original>
